<compile_context>
chip_gen: v7x
topology: tpu7x:2x2x1
jax: 0.10.0
libtpu: 0.0.40
codegen_flags: <defaults>
</compile_context>

<pallas_src>
import math

import jax
import jax.numpy as jnp
from jax.experimental import pallas as pl
from jax.experimental.pallas import tpu as pltpu


def _add_add_kernel(x71_ref, x57_ref, x86_ref, out_ref):
    # x72 = x71 + x57 ; x87 = x86 + x72
    out_ref[...] = x86_ref[...] + (x71_ref[...] + x57_ref[...])


_MAX_TILE_ROWS = 512                      # 512 x 1024 f32 = 2 MiB per buffer
_LANE_CANDIDATES = (1024, 896, 768, 640, 512, 384, 256, 128)


def _sublane(dtype):
    # Sublane packing multiple per dtype width (f32: 8, bf16: 16, int8/fp8: 32).
    return {4: 8, 2: 16, 1: 32}.get(jnp.dtype(dtype).itemsize, 8)


def _choose_layout(total, dtype):
    """Pick (lanes, rows_padded, tile_rows, pad_elems) for a flat elementwise op."""
    sub = _sublane(dtype)

    # Pass 1: padding-free AND sublane-aligned rows -> clean, pipelineable grid.
    for lanes in _LANE_CANDIDATES:
        if total % lanes:
            continue
        rows = total // lanes
        if rows % sub:
            continue
        if rows > _MAX_TILE_ROWS:
            tile_rows = _MAX_TILE_ROWS           # ragged last block is fine
        elif rows % (2 * sub) == 0 and rows >= 2 * sub:
            tile_rows = rows // 2                # >=2 grid steps: overlap / 2 TCs
        else:
            tile_rows = rows                     # tiny: single block
        return lanes, rows, tile_rows, 0

    # Pass 2: padding-free single full-array block (rows need not be aligned).
    for lanes in _LANE_CANDIDATES:
        if total % lanes == 0 and total // lanes <= _MAX_TILE_ROWS:
            rows = total // lanes
            return lanes, rows, rows, 0

    # Pass 3: fallback — pad only up to the dtype's sublane multiple.
    lanes = 1024 if total >= 1024 else 128
    rows_padded = ((pl.cdiv(total, lanes) + sub - 1) // sub) * sub
    tile_rows = min(rows_padded, _MAX_TILE_ROWS)
    pad = rows_padded * lanes - total
    return lanes, rows_padded, tile_rows, pad


def add_add(x71, x57, x86):
    assert x71.shape == x57.shape == x86.shape
    assert x71.dtype == x57.dtype == x86.dtype
    orig_shape = x71.shape
    dtype = x71.dtype
    itemsize = jnp.dtype(dtype).itemsize
    total = math.prod(orig_shape)

    lanes, rows_padded, tile_rows, pad = _choose_layout(total, dtype)

    def _prep(x):
        xf = x.reshape(-1)
        if pad:
            xf = jnp.pad(xf, (0, pad))
        return xf.reshape(rows_padded, lanes)

    a = _prep(x71)
    b = _prep(x57)
    c = _prep(x86)

    n_tiles = pl.cdiv(rows_padded, tile_rows)
    spec = pl.BlockSpec((tile_rows, lanes), lambda i: (i, 0))

    out2d = pl.pallas_call(
        _add_add_kernel,
        out_shape=jax.ShapeDtypeStruct((rows_padded, lanes), dtype),
        grid=(n_tiles,),
        in_specs=[spec, spec, spec],
        out_specs=spec,
        compiler_params=pltpu.CompilerParams(
            dimension_semantics=("parallel",),
            vmem_limit_bytes=32 * 1024 * 1024,
        ),
        cost_estimate=pl.CostEstimate(
            flops=2 * total,
            bytes_accessed=4 * total * itemsize,  # 3 reads + 1 write
            transcendentals=0,
        ),
    )(a, b, c)

    out_flat = out2d.reshape(-1)
    if pad:
        out_flat = out_flat[:total]
    return out_flat.reshape(orig_shape)


if __name__ == "__main__":
    key = jax.random.PRNGKey(0)
    k1, k2, k3 = jax.random.split(key, 3)

    # Shape taken directly from the module spec: (1, 32, 56, 56).
    # 1*32*56*56 = 100,352 = 112 * 896 -> padding-free (56, 896) tiles, grid=(2,).
    shape = (1, 32, 56, 56)
    x71 = jax.random.normal(k1, shape, dtype=jnp.float32)
    x57 = jax.random.normal(k2, shape, dtype=jnp.float32)
    x86 = jax.random.normal(k3, shape, dtype=jnp.float32)

    out = add_add(x71, x57, x86)
    out = jax.block_until_ready(out)

    # Reference check (plain JAX) to verify semantics.
    ref = x86 + (x71 + x57)
    assert out.shape == shape
    assert jnp.allclose(out, ref, atol=1e-6, rtol=1e-6)

    print("KERNEL_OK")
</pallas_src>

<mosaic_0001>
module attributes {stable_mosaic.version = 11 : i64} {
  func.func @_add_add_kernel(%arg0: i32, %arg1: memref<56x896xf32, #tpu.memory_space<vmem>>, %arg2: memref<56x896xf32, #tpu.memory_space<vmem>>, %arg3: memref<56x896xf32, #tpu.memory_space<vmem>>, %arg4: memref<56x896xf32, #tpu.memory_space<vmem>>) attributes {dimension_semantics = [#tpu.dimension_semantics<parallel>], iteration_bounds = array<i64: 2>, scalar_prefetch = 0 : i64, scratch_operands = 0 : i64, tpu.core_type = #tpu.core_type<tc>, window_params = [{transform_indices = @transform_0, window_bounds = array<i64: 56, 896>}, {transform_indices = @transform_1, window_bounds = array<i64: 56, 896>}, {transform_indices = @transform_2, window_bounds = array<i64: 56, 896>}, {transform_indices = @transform_3, window_bounds = array<i64: 56, 896>}]} {
    %c0 = arith.constant 0 : index
    %c0_0 = arith.constant 0 : index
    %0 = vector.load %arg3[%c0, %c0_0] : memref<56x896xf32, #tpu.memory_space<vmem>>, vector<56x896xf32>
    %c0_1 = arith.constant 0 : index
    %c0_2 = arith.constant 0 : index
    %1 = vector.load %arg1[%c0_1, %c0_2] : memref<56x896xf32, #tpu.memory_space<vmem>>, vector<56x896xf32>
    %c0_3 = arith.constant 0 : index
    %c0_4 = arith.constant 0 : index
    %2 = vector.load %arg2[%c0_3, %c0_4] : memref<56x896xf32, #tpu.memory_space<vmem>>, vector<56x896xf32>
    %3 = arith.addf %1, %2 : vector<56x896xf32>
    %4 = arith.addf %0, %3 : vector<56x896xf32>
    %c0_5 = arith.constant 0 : index
    %c0_6 = arith.constant 0 : index
    %5 = vector.load %arg4[%c0_5, %c0_6] : memref<56x896xf32, #tpu.memory_space<vmem>>, vector<56x896xf32>
    tpu.vector_store %arg4[%c0_5, %c0_6], %4 {strides = array<i32>} : memref<56x896xf32, #tpu.memory_space<vmem>>, vector<56x896xf32>,
    return
  }
  func.func @transform_0(%arg0: i32) -> (i32, i32) {
    %c0_i32 = arith.constant 0 : i32
    %c0_i32_0 = arith.constant 0 : i32
    return %arg0, %c0_i32 : i32, i32
  }
  func.func @transform_1(%arg0: i32) -> (i32, i32) {
    %c0_i32 = arith.constant 0 : i32
    %c0_i32_0 = arith.constant 0 : i32
    return %arg0, %c0_i32 : i32, i32
  }
  func.func @transform_2(%arg0: i32) -> (i32, i32) {
    %c0_i32 = arith.constant 0 : i32
    %c0_i32_0 = arith.constant 0 : i32
    return %arg0, %c0_i32 : i32, i32
  }
  func.func @transform_3(%arg0: i32) -> (i32, i32) {
    %c0_i32 = arith.constant 0 : i32
    %c0_i32_0 = arith.constant 0 : i32
    return %arg0, %c0_i32 : i32, i32
  }
}

</mosaic_0001>

<llo_original>
// kernel: tpu_custom_call.1
$region0: #{tpu_custom_call.1}
  #allocation0 [shape = 'u32[]', space=smem, size = 0x4, offset = 0x4, fixed_abs, tag = 'smem constant byte address 0x4 - core index']
  #allocation1 [shape = 'u32[144,128]{1,0:T(1,128)}', space=vmem, size = 0x12000, scoped, tag = 'internal scratch']
  %s0 = inlined_call_operand.hbm [shape: f32[112,896], index: 0, kind: input, shape index: {}]
  %s1 = inlined_call_operand.hbm [shape: f32[112,896], index: 1, kind: input, shape index: {}]
  %s2 = inlined_call_operand.hbm [shape: f32[112,896], index: 2, kind: input, shape index: {}]
  %s3 = inlined_call_operand.hbm [shape: f32[112,896], index: 3, kind: output, shape index: {}]
  %s4 = sld [smem:[#allocation0]]
  $region57: #{tpu_custom_call.1} parent=0
    _
  %s6 = ssub.s32 1, %s4
  %s7 = scalar_select 0, %s6, %s4
  $region1: #{tpu_custom_call.1} parent=0
    #allocation2 [shape = 'u8[401408]{0}', space=vmem, size = 0x62000, scoped, tag = 'input window, operand 0']
    #allocation3 [shape = 's32[2]{0}', space=sflag, size = 0x8, scoped, tag = 'scoped memory for tpu_custom_call.1']
    #allocation4 [shape = 's32[2]{0}', space=sflag, size = 0x8, scoped, tag = 'scoped memory for tpu_custom_call.1']
    #allocation5 [shape = 'u8[401408]{0}', space=vmem, size = 0x62000, scoped, tag = 'input window, operand 1']
    #allocation6 [shape = 's32[2]{0}', space=sflag, size = 0x8, scoped, tag = 'scoped memory for tpu_custom_call.1']
    #allocation7 [shape = 'u8[401408]{0}', space=vmem, size = 0x62000, scoped, tag = 'input window, operand 2']
    #allocation8 [shape = 'u8[401408]{0}', space=vmem, size = 0x62000, scoped, tag = 'output window, operand 0']
    %8 = vsyncpa [#allocation3], 0
    %s9 = scalar_lea.sflag [#allocation3], 1
    %10 = vsyncpa %s9, 0
    %11 = vsyncpa [#allocation6], 0
    %s12 = scalar_lea.sflag [#allocation6], 1
    %13 = vsyncpa %s12, 0
    %14 = vsyncpa [#allocation4], 0
    %s15 = scalar_lea.sflag [#allocation4], 1
    %16 = vsyncpa %s15, 0
    loop: start=0, step=1, limit=4
    $region2: #{tpu_custom_call.1} parent=1 // loop_pre_header
      _
    $region3: #{tpu_custom_call.1} parent=1 // loop_header
      %s18 = sphi 0, %s22
      %p19 = scmp.ge.s32.totalorder %s18, 4
      %s28 = sphi 0, %s30
      %s31 = sphi 0, %s28
      %s32 = sphi 0, %s31
      %s48 = sphi 0, %s32
      %s54 = sphi 0, %s56
      %s57 = sphi 0, %s54
      %s58 = sphi 0, %s57
      %s74 = sphi 0, %s58
      %s80 = sphi 0, %s82
      %s83 = sphi 0, %s80
      %s84 = sphi 0, %s83
      %s100 = sphi 0, %s84
      %s106 = sphi 0, %s108
      %s109 = sphi 0, %s106
      %s110 = sphi 0, %s109
      %s126 = sphi 0, %s110
    $region4: #{tpu_custom_call.1} parent=1 // loop_header_branch
      %21 = sbr.rel (%p19) target = $region8
    $region5: #{tpu_custom_call.1} parent=1 // loop_body
      %s23 = ssub.s32 %s18, 1
      %s24 = ssub.s32 %s18, 2
      %s25 = sadd.s32 %s18, 1
      %s26 = ssub.s32 %s18, %s25
      %p27 = scmp.eq.s32.totalorder %s26, 0
      %s29 = sadd.s32 %s28, 1
      %s30 = scalar_select %p27, %s28, %s29
      %p33 = pneg %p27
      %p34 = scmp.eq.s32.totalorder %s18, 1
      %p35 = por %p33, %p34
      %p36 = scmp.ne.s32.totalorder %s28, %s31
      %p37 = scmp.eq.s32.totalorder %s18, 0
      %p38 = por %p36, %p37
      %p39 = scmp.ne.s32.totalorder %s28, %s31
      %p40 = scmp.eq.s32.totalorder %s23, 1
      %p41 = por %p39, %p40
      %p42 = scmp.ne.s32.totalorder %s31, %s32
      %p43 = scmp.eq.s32.totalorder %s23, 0
      %p44 = por %p42, %p43
      %p45 = scmp.ne.s32.totalorder %s31, %s32
      %p46 = scmp.eq.s32.totalorder %s24, 1
      %p47 = por %p45, %p46
      %p49 = scmp.ne.s32.totalorder %s32, %s48
      %p50 = scmp.eq.s32.totalorder %s24, 0
      %p51 = por %p49, %p50
      %s52 = ssub.s32 %s18, %s25
      %p53 = scmp.eq.s32.totalorder %s52, 0
      %s55 = sadd.s32 %s54, 1
      %s56 = scalar_select %p53, %s54, %s55
      %p59 = pneg %p53
      %p60 = scmp.eq.s32.totalorder %s18, 1
      %p61 = por %p59, %p60
      %p62 = scmp.ne.s32.totalorder %s54, %s57
      %p63 = scmp.eq.s32.totalorder %s18, 0
      %p64 = por %p62, %p63
      %p65 = scmp.ne.s32.totalorder %s54, %s57
      %p66 = scmp.eq.s32.totalorder %s23, 1
      %p67 = por %p65, %p66
      %p68 = scmp.ne.s32.totalorder %s57, %s58
      %p69 = scmp.eq.s32.totalorder %s23, 0
      %p70 = por %p68, %p69
      %p71 = scmp.ne.s32.totalorder %s57, %s58
      %p72 = scmp.eq.s32.totalorder %s24, 1
      %p73 = por %p71, %p72
      %p75 = scmp.ne.s32.totalorder %s58, %s74
      %p76 = scmp.eq.s32.totalorder %s24, 0
      %p77 = por %p75, %p76
      %s78 = ssub.s32 %s18, %s25
      %p79 = scmp.eq.s32.totalorder %s78, 0
      %s81 = sadd.s32 %s80, 1
      %s82 = scalar_select %p79, %s80, %s81
      %p85 = pneg %p79
      %p86 = scmp.eq.s32.totalorder %s18, 1
      %p87 = por %p85, %p86
      %p88 = scmp.ne.s32.totalorder %s80, %s83
      %p89 = scmp.eq.s32.totalorder %s18, 0
      %p90 = por %p88, %p89
      %p91 = scmp.ne.s32.totalorder %s80, %s83
      %p92 = scmp.eq.s32.totalorder %s23, 1
      %p93 = por %p91, %p92
      %p94 = scmp.ne.s32.totalorder %s83, %s84
      %p95 = scmp.eq.s32.totalorder %s23, 0
      %p96 = por %p94, %p95
      %p97 = scmp.ne.s32.totalorder %s83, %s84
      %p98 = scmp.eq.s32.totalorder %s24, 1
      %p99 = por %p97, %p98
      %p101 = scmp.ne.s32.totalorder %s84, %s100
      %p102 = scmp.eq.s32.totalorder %s24, 0
      %p103 = por %p101, %p102
      %s104 = ssub.s32 %s18, %s25
      %p105 = scmp.eq.s32.totalorder %s104, 0
      %s107 = sadd.s32 %s106, 1
      %s108 = scalar_select %p105, %s106, %s107
      %p111 = pneg %p105
      %p112 = scmp.eq.s32.totalorder %s18, 1
      %p113 = por %p111, %p112
      %p114 = scmp.ne.s32.totalorder %s106, %s109
      %p115 = scmp.eq.s32.totalorder %s18, 0
      %p116 = por %p114, %p115
      %p117 = scmp.ne.s32.totalorder %s106, %s109
      %p118 = scmp.eq.s32.totalorder %s23, 1
      %p119 = por %p117, %p118
      %p120 = scmp.ne.s32.totalorder %s109, %s110
      %p121 = scmp.eq.s32.totalorder %s23, 0
      %p122 = por %p120, %p121
      %p123 = scmp.ne.s32.totalorder %s109, %s110
      %p124 = scmp.eq.s32.totalorder %s24, 1
      %p125 = por %p123, %p124
      %p127 = scmp.ne.s32.totalorder %s110, %s126
      %p128 = scmp.eq.s32.totalorder %s24, 0
      %p129 = por %p127, %p128
      %p130 = scmp.le.s32.totalorder 1, %s18
      %p131 = scmp.lt.s32.totalorder %s18, 3
      %p132 = pnand %p130, %p131
      %p133 = pneg %p132
      // Predicated region
      $region9: #{tpu_custom_call.1} parent=5 // pred_check
        _
      $region10: #{tpu_custom_call.1} parent=5 // pred_check_branch
        %135 = sbr.rel (%p132) target = $region12
      $region11: #{tpu_custom_call.1} parent=5 // pred_region
        %s136 = ssub.s32 %s18, 1
      $region12: #{tpu_custom_call.1} parent=5 // pred_fallthru
        _
      %p137 = scmp.lt.s32.totalorder %s18, 2
      // Predicated region
      $region13: #{tpu_custom_call.1} parent=5 // pred_check
        %p138 = pneg %p137
      $region14: #{tpu_custom_call.1} parent=5 // pred_check_branch
        %140 = sbr.rel (%p138) target = $region16
      $region15: #{tpu_custom_call.1} parent=5 // pred_region
        // Predicated region
        $region17: #{tpu_custom_call.1} parent=15 // pred_check
          %p141 = pneg %p38
        $region18: #{tpu_custom_call.1} parent=15 // pred_check_branch
          %143 = sbr.rel (%p141) target = $region20
        $region19: #{tpu_custom_call.1} parent=15 // pred_region
          %s144 = sand.u32 %s28, 1
          %s145 = scalar_lea.sflag [#allocation3], %s144
          %s146 = sand.u32 %s28, 1
          %s147 = smul.addr %s146, 392
          %s148 = scalar_lea.vmem [#allocation2], %s147
          %s149 = smul.u32 7, %s18
          %s151 = ssub.s32 6272, 6272
          %152 = vsyncadd %s145, %s151
          %s153 = smul.addr %s149, 7
          %s154 = smul.addr %s153, 128
          %s155 = scalar_lea.hbm %s0, %s154
          %s156 = sshll.u32 %s148, 4
          %s157 = int_to_ptr.vmem [resolvable:$true] %s156
          %162 = dma.hbm_to_vmem [thread:$0]  %s155, 6272, %s157, %s145, 896, 896, 56
        $region20: #{tpu_custom_call.1} parent=15 // pred_fallthru
          _
        // Predicated region
        $region21: #{tpu_custom_call.1} parent=15 // pred_check
          %p163 = pneg %p64
        $region22: #{tpu_custom_call.1} parent=15 // pred_check_branch
          %165 = sbr.rel (%p163) target = $region24
        $region23: #{tpu_custom_call.1} parent=15 // pred_region
          %s166 = sand.u32 %s18, 1
          %s167 = scalar_lea.sflag [#allocation6], %s166
          %s168 = sand.u32 %s54, 1
          %s169 = smul.addr %s168, 392
          %s170 = scalar_lea.vmem [#allocation5], %s169
          %s171 = smul.u32 7, %s18
          %s173 = ssub.s32 6272, 6272
          %174 = vsyncadd %s167, %s173
          %s175 = smul.addr %s171, 7
          %s176 = smul.addr %s175, 128
          %s177 = scalar_lea.hbm %s1, %s176
          %s178 = sshll.u32 %s170, 4
          %s179 = int_to_ptr.vmem [resolvable:$true] %s178
          %184 = dma.hbm_to_vmem [thread:$0]  %s177, 6272, %s179, %s167, 896, 896, 56
        $region24: #{tpu_custom_call.1} parent=15 // pred_fallthru
          _
        // Predicated region
        $region25: #{tpu_custom_call.1} parent=15 // pred_check
          %p185 = pneg %p90
        $region26: #{tpu_custom_call.1} parent=15 // pred_check_branch
          %187 = sbr.rel (%p185) target = $region28
        $region27: #{tpu_custom_call.1} parent=15 // pred_region
          %s188 = sand.u32 %s18, 1
          %s189 = scalar_lea.sflag [#allocation6], %s188
          %s190 = sand.u32 %s80, 1
          %s191 = smul.addr %s190, 392
          %s192 = scalar_lea.vmem [#allocation7], %s191
          %s193 = smul.u32 7, %s18
          %s195 = ssub.s32 6272, 6272
          %196 = vsyncadd %s189, %s195
          %s197 = smul.addr %s193, 7
          %s198 = smul.addr %s197, 128
          %s199 = scalar_lea.hbm %s2, %s198
          %s200 = sshll.u32 %s192, 4
          %s201 = int_to_ptr.vmem [resolvable:$true] %s200
          %206 = dma.hbm_to_vmem [thread:$0]  %s199, 6272, %s201, %s189, 896, 896, 56
        $region28: #{tpu_custom_call.1} parent=15 // pred_fallthru
          _
      $region16: #{tpu_custom_call.1} parent=5 // pred_fallthru
        _
      %p207 = scmp.le.s32.totalorder 1, %s18
      %p208 = scmp.lt.s32.totalorder %s18, 3
      %p209 = pnand %p207, %p208
      %p210 = pneg %p209
      // Predicated region
      $region29: #{tpu_custom_call.1} parent=5 // pred_check
        _
      $region30: #{tpu_custom_call.1} parent=5 // pred_check_branch
        %212 = sbr.rel (%p209) target = $region32
      $region31: #{tpu_custom_call.1} parent=5 // pred_region
        %s213 = ssub.s32 %s18, 1
        %s214 = sand.u32 %s31, 1
        %s215 = scalar_lea.sflag [#allocation3], %s214
        %s216 = sand.u32 %s31, 1
        %s217 = smul.addr %s216, 392
        %s218 = scalar_lea.vmem [#allocation2], %s217
        // Predicated region
        $region33: #{tpu_custom_call.1} parent=31 // pred_check
          %p219 = pneg %p44
        $region34: #{tpu_custom_call.1} parent=31 // pred_check_branch
          %221 = sbr.rel (%p219) target = $region36
        $region35: #{tpu_custom_call.1} parent=31 // pred_region
          %222 = dma.done %s215, 6272
        $region36: #{tpu_custom_call.1} parent=31 // pred_fallthru
          _
        %s223 = sand.u32 %s23, 1
        %s224 = scalar_lea.sflag [#allocation6], %s223
        %s225 = sand.u32 %s57, 1
        %s226 = smul.addr %s225, 392
        %s227 = scalar_lea.vmem [#allocation5], %s226
        // Predicated region
        $region37: #{tpu_custom_call.1} parent=31 // pred_check
          %p228 = pneg %p70
        $region38: #{tpu_custom_call.1} parent=31 // pred_check_branch
          %230 = sbr.rel (%p228) target = $region40
        $region39: #{tpu_custom_call.1} parent=31 // pred_region
          %231 = dma.done %s224, 6272
        $region40: #{tpu_custom_call.1} parent=31 // pred_fallthru
          _
        %s232 = sand.u32 %s23, 1
        %s233 = scalar_lea.sflag [#allocation6], %s232
        %s234 = sand.u32 %s83, 1
        %s235 = smul.addr %s234, 392
        %s236 = scalar_lea.vmem [#allocation7], %s235
        // Predicated region
        $region41: #{tpu_custom_call.1} parent=31 // pred_check
          %p237 = pneg %p96
        $region42: #{tpu_custom_call.1} parent=31 // pred_check_branch
          %239 = sbr.rel (%p237) target = $region44
        $region43: #{tpu_custom_call.1} parent=31 // pred_region
          %240 = dma.done %s233, 6272
        $region44: #{tpu_custom_call.1} parent=31 // pred_fallthru
          _
        %s241 = sand.u32 %s31, 1
        %s242 = scalar_lea.sflag [#allocation3], %s241
        %s243 = sand.u32 %s31, 1
        %s244 = smul.addr %s243, 392
        %s245 = scalar_lea.vmem [#allocation2], %s244
        %p246 = pneg %p44
        %p247 = pneg %p41
        %s248 = sand.u32 %s23, 1
        %s249 = scalar_lea.sflag [#allocation6], %s248
        %s250 = sand.u32 %s57, 1
        %s251 = smul.addr %s250, 392
        %s252 = scalar_lea.vmem [#allocation5], %s251
        %p253 = pneg %p70
        %p254 = pneg %p67
        %s255 = sand.u32 %s23, 1
        %s256 = scalar_lea.sflag [#allocation6], %s255
        %s257 = sand.u32 %s83, 1
        %s258 = smul.addr %s257, 392
        %s259 = scalar_lea.vmem [#allocation7], %s258
        %p260 = pneg %p96
        %p261 = pneg %p93
        %p262 = pneg %p122
        %p263 = pneg %p119
        %s264 = sand.u32 %s109, 1
        %s265 = scalar_lea.sflag [#allocation4], %s264
        %s266 = sand.u32 %s109, 1
        %s267 = smul.addr %s266, 392
        %s268 = scalar_lea.vmem [#allocation8], %s267
        %s269 = smul.u32 7, %s23
        %s270 = smul.u32 7, %s23
        %s271 = smul.u32 7, %s23
        %s272 = smul.u32 7, %s23
        %v273 = vld [vmem:[%s236] sm:$0xff]
        %v274 = vld [vmem:[%s236 + $0x8] sm:$0xff]
        %v275 = vld [vmem:[%s236 + $0x10] sm:$0xff]
        %v276 = vld [vmem:[%s236 + $0x18] sm:$0xff]
        %v277 = vld [vmem:[%s236 + $0x20] sm:$0xff]
        %v278 = vld [vmem:[%s236 + $0x28] sm:$0xff]
        %v279 = vld [vmem:[%s236 + $0x30] sm:$0xff]
        %v280 = vld [vmem:[%s236 + $0x38] sm:$0xff]
        %v281 = vld [vmem:[%s236 + $0x40] sm:$0xff]
        %v282 = vld [vmem:[%s236 + $0x48] sm:$0xff]
        %v283 = vld [vmem:[%s236 + $0x50] sm:$0xff]
        %v284 = vld [vmem:[%s236 + $0x58] sm:$0xff]
        %v285 = vld [vmem:[%s236 + $0x60] sm:$0xff]
        %v286 = vld [vmem:[%s236 + $0x68] sm:$0xff]
        %v287 = vld [vmem:[%s236 + $0x70] sm:$0xff]
        %v288 = vld [vmem:[%s236 + $0x78] sm:$0xff]
        %v289 = vld [vmem:[%s236 + $0x80] sm:$0xff]
        %v290 = vld [vmem:[%s236 + $0x88] sm:$0xff]
        %v291 = vld [vmem:[%s236 + $0x90] sm:$0xff]
        %v292 = vld [vmem:[%s236 + $0x98] sm:$0xff]
        %v293 = vld [vmem:[%s236 + $0xa0] sm:$0xff]
        %v294 = vld [vmem:[%s236 + $0xa8] sm:$0xff]
        %v295 = vld [vmem:[%s236 + $0xb0] sm:$0xff]
        %v296 = vld [vmem:[%s236 + $0xb8] sm:$0xff]
        %v297 = vld [vmem:[%s236 + $0xc0] sm:$0xff]
        %v298 = vld [vmem:[%s236 + $0xc8] sm:$0xff]
        %v299 = vld [vmem:[%s236 + $0xd0] sm:$0xff]
        %v300 = vld [vmem:[%s236 + $0xd8] sm:$0xff]
        %v301 = vld [vmem:[%s236 + $0xe0] sm:$0xff]
        %v302 = vld [vmem:[%s236 + $0xe8] sm:$0xff]
        %v303 = vld [vmem:[%s236 + $0xf0] sm:$0xff]
        %v304 = vld [vmem:[%s236 + $0xf8] sm:$0xff]
        %v305 = vld [vmem:[%s236 + $0x100] sm:$0xff]
        %v306 = vld [vmem:[%s236 + $0x108] sm:$0xff]
        %v307 = vld [vmem:[%s236 + $0x110] sm:$0xff]
        %v308 = vld [vmem:[%s236 + $0x118] sm:$0xff]
        %v309 = vld [vmem:[%s236 + $0x120] sm:$0xff]
        %v310 = vld [vmem:[%s236 + $0x128] sm:$0xff]
        %v311 = vld [vmem:[%s236 + $0x130] sm:$0xff]
        %v312 = vld [vmem:[%s236 + $0x138] sm:$0xff]
        %v313 = vld [vmem:[%s236 + $0x140] sm:$0xff]
        %v314 = vld [vmem:[%s236 + $0x148] sm:$0xff]
        %v315 = vld [vmem:[%s236 + $0x150] sm:$0xff]
        %v316 = vld [vmem:[%s236 + $0x158] sm:$0xff]
        %v317 = vld [vmem:[%s236 + $0x160] sm:$0xff]
        %v318 = vld [vmem:[%s236 + $0x168] sm:$0xff]
        %v319 = vld [vmem:[%s236 + $0x170] sm:$0xff]
        %v320 = vld [vmem:[%s236 + $0x178] sm:$0xff]
        %v321 = vld [vmem:[%s236 + $0x180] sm:$0xff]
        %v322 = vld [vmem:[%s218] sm:$0xff]
        %v323 = vld [vmem:[%s218 + $0x8] sm:$0xff]
        %v324 = vld [vmem:[%s218 + $0x10] sm:$0xff]
        %v325 = vld [vmem:[%s218 + $0x18] sm:$0xff]
        %v326 = vld [vmem:[%s218 + $0x20] sm:$0xff]
        %v327 = vld [vmem:[%s218 + $0x28] sm:$0xff]
        %v328 = vld [vmem:[%s218 + $0x30] sm:$0xff]
        %v329 = vld [vmem:[%s218 + $0x38] sm:$0xff]
        %v330 = vld [vmem:[%s218 + $0x40] sm:$0xff]
        %v331 = vld [vmem:[%s218 + $0x48] sm:$0xff]
        %v332 = vld [vmem:[%s218 + $0x50] sm:$0xff]
        %v333 = vld [vmem:[%s218 + $0x58] sm:$0xff]
        %v334 = vld [vmem:[%s218 + $0x60] sm:$0xff]
        %v335 = vld [vmem:[%s218 + $0x68] sm:$0xff]
        %v336 = vld [vmem:[%s218 + $0x70] sm:$0xff]
        %v337 = vld [vmem:[%s218 + $0x78] sm:$0xff]
        %v338 = vld [vmem:[%s218 + $0x80] sm:$0xff]
        %v339 = vld [vmem:[%s218 + $0x88] sm:$0xff]
        %v340 = vld [vmem:[%s218 + $0x90] sm:$0xff]
        %v341 = vld [vmem:[%s218 + $0x98] sm:$0xff]
        %v342 = vld [vmem:[%s218 + $0xa0] sm:$0xff]
        %v343 = vld [vmem:[%s218 + $0xa8] sm:$0xff]
        %v344 = vld [vmem:[%s218 + $0xb0] sm:$0xff]
        %v345 = vld [vmem:[%s218 + $0xb8] sm:$0xff]
        %v346 = vld [vmem:[%s218 + $0xc0] sm:$0xff]
        %v347 = vld [vmem:[%s218 + $0xc8] sm:$0xff]
        %v348 = vld [vmem:[%s218 + $0xd0] sm:$0xff]
        %v349 = vld [vmem:[%s218 + $0xd8] sm:$0xff]
        %v350 = vld [vmem:[%s218 + $0xe0] sm:$0xff]
        %v351 = vld [vmem:[%s218 + $0xe8] sm:$0xff]
        %v352 = vld [vmem:[%s218 + $0xf0] sm:$0xff]
        %v353 = vld [vmem:[%s218 + $0xf8] sm:$0xff]
        %v354 = vld [vmem:[%s218 + $0x100] sm:$0xff]
        %v355 = vld [vmem:[%s218 + $0x108] sm:$0xff]
        %v356 = vld [vmem:[%s218 + $0x110] sm:$0xff]
        %v357 = vld [vmem:[%s218 + $0x118] sm:$0xff]
        %v358 = vld [vmem:[%s218 + $0x120] sm:$0xff]
        %v359 = vld [vmem:[%s218 + $0x128] sm:$0xff]
        %v360 = vld [vmem:[%s218 + $0x130] sm:$0xff]
        %v361 = vld [vmem:[%s218 + $0x138] sm:$0xff]
        %v362 = vld [vmem:[%s218 + $0x140] sm:$0xff]
        %v363 = vld [vmem:[%s218 + $0x148] sm:$0xff]
        %v364 = vld [vmem:[%s218 + $0x150] sm:$0xff]
        %v365 = vld [vmem:[%s218 + $0x158] sm:$0xff]
        %v366 = vld [vmem:[%s218 + $0x160] sm:$0xff]
        %v367 = vld [vmem:[%s218 + $0x168] sm:$0xff]
        %v368 = vld [vmem:[%s218 + $0x170] sm:$0xff]
        %v369 = vld [vmem:[%s218 + $0x178] sm:$0xff]
        %v370 = vld [vmem:[%s218 + $0x180] sm:$0xff]
        %v371 = vld [vmem:[%s227] sm:$0xff]
        %v372 = vld [vmem:[%s227 + $0x8] sm:$0xff]
        %v373 = vld [vmem:[%s227 + $0x10] sm:$0xff]
        %v374 = vld [vmem:[%s227 + $0x18] sm:$0xff]
        %v375 = vld [vmem:[%s227 + $0x20] sm:$0xff]
        %v376 = vld [vmem:[%s227 + $0x28] sm:$0xff]
        %v377 = vld [vmem:[%s227 + $0x30] sm:$0xff]
        %v378 = vld [vmem:[%s227 + $0x38] sm:$0xff]
        %v379 = vld [vmem:[%s227 + $0x40] sm:$0xff]
        %v380 = vld [vmem:[%s227 + $0x48] sm:$0xff]
        %v381 = vld [vmem:[%s227 + $0x50] sm:$0xff]
        %v382 = vld [vmem:[%s227 + $0x58] sm:$0xff]
        %v383 = vld [vmem:[%s227 + $0x60] sm:$0xff]
        %v384 = vld [vmem:[%s227 + $0x68] sm:$0xff]
        %v385 = vld [vmem:[%s227 + $0x70] sm:$0xff]
        %v386 = vld [vmem:[%s227 + $0x78] sm:$0xff]
        %v387 = vld [vmem:[%s227 + $0x80] sm:$0xff]
        %v388 = vld [vmem:[%s227 + $0x88] sm:$0xff]
        %v389 = vld [vmem:[%s227 + $0x90] sm:$0xff]
        %v390 = vld [vmem:[%s227 + $0x98] sm:$0xff]
        %v391 = vld [vmem:[%s227 + $0xa0] sm:$0xff]
        %v392 = vld [vmem:[%s227 + $0xa8] sm:$0xff]
        %v393 = vld [vmem:[%s227 + $0xb0] sm:$0xff]
        %v394 = vld [vmem:[%s227 + $0xb8] sm:$0xff]
        %v395 = vld [vmem:[%s227 + $0xc0] sm:$0xff]
        %v396 = vld [vmem:[%s227 + $0xc8] sm:$0xff]
        %v397 = vld [vmem:[%s227 + $0xd0] sm:$0xff]
        %v398 = vld [vmem:[%s227 + $0xd8] sm:$0xff]
        %v399 = vld [vmem:[%s227 + $0xe0] sm:$0xff]
        %v400 = vld [vmem:[%s227 + $0xe8] sm:$0xff]
        %v401 = vld [vmem:[%s227 + $0xf0] sm:$0xff]
        %v402 = vld [vmem:[%s227 + $0xf8] sm:$0xff]
        %v403 = vld [vmem:[%s227 + $0x100] sm:$0xff]
        %v404 = vld [vmem:[%s227 + $0x108] sm:$0xff]
        %v405 = vld [vmem:[%s227 + $0x110] sm:$0xff]
        %v406 = vld [vmem:[%s227 + $0x118] sm:$0xff]
        %v407 = vld [vmem:[%s227 + $0x120] sm:$0xff]
        %v408 = vld [vmem:[%s227 + $0x128] sm:$0xff]
        %v409 = vld [vmem:[%s227 + $0x130] sm:$0xff]
        %v410 = vld [vmem:[%s227 + $0x138] sm:$0xff]
        %v411 = vld [vmem:[%s227 + $0x140] sm:$0xff]
        %v412 = vld [vmem:[%s227 + $0x148] sm:$0xff]
        %v413 = vld [vmem:[%s227 + $0x150] sm:$0xff]
        %v414 = vld [vmem:[%s227 + $0x158] sm:$0xff]
        %v415 = vld [vmem:[%s227 + $0x160] sm:$0xff]
        %v416 = vld [vmem:[%s227 + $0x168] sm:$0xff]
        %v417 = vld [vmem:[%s227 + $0x170] sm:$0xff]
        %v418 = vld [vmem:[%s227 + $0x178] sm:$0xff]
        %v419 = vld [vmem:[%s227 + $0x180] sm:$0xff]
        %v420 = vadd.f32 %v322, %v371
        %v421 = vadd.f32 %v323, %v372
        %v422 = vadd.f32 %v324, %v373
        %v423 = vadd.f32 %v325, %v374
        %v424 = vadd.f32 %v326, %v375
        %v425 = vadd.f32 %v327, %v376
        %v426 = vadd.f32 %v328, %v377
        %v427 = vadd.f32 %v329, %v378
        %v428 = vadd.f32 %v330, %v379
        %v429 = vadd.f32 %v331, %v380
        %v430 = vadd.f32 %v332, %v381
        %v431 = vadd.f32 %v333, %v382
        %v432 = vadd.f32 %v334, %v383
        %v433 = vadd.f32 %v335, %v384
        %v434 = vadd.f32 %v336, %v385
        %v435 = vadd.f32 %v337, %v386
        %v436 = vadd.f32 %v338, %v387
        %v437 = vadd.f32 %v339, %v388
        %v438 = vadd.f32 %v340, %v389
        %v439 = vadd.f32 %v341, %v390
        %v440 = vadd.f32 %v342, %v391
        %v441 = vadd.f32 %v343, %v392
        %v442 = vadd.f32 %v344, %v393
        %v443 = vadd.f32 %v345, %v394
        %v444 = vadd.f32 %v346, %v395
        %v445 = vadd.f32 %v347, %v396
        %v446 = vadd.f32 %v348, %v397
        %v447 = vadd.f32 %v349, %v398
        %v448 = vadd.f32 %v350, %v399
        %v449 = vadd.f32 %v351, %v400
        %v450 = vadd.f32 %v352, %v401
        %v451 = vadd.f32 %v353, %v402
        %v452 = vadd.f32 %v354, %v403
        %v453 = vadd.f32 %v355, %v404
        %v454 = vadd.f32 %v356, %v405
        %v455 = vadd.f32 %v357, %v406
        %v456 = vadd.f32 %v358, %v407
        %v457 = vadd.f32 %v359, %v408
        %v458 = vadd.f32 %v360, %v409
        %v459 = vadd.f32 %v361, %v410
        %v460 = vadd.f32 %v362, %v411
        %v461 = vadd.f32 %v363, %v412
        %v462 = vadd.f32 %v364, %v413
        %v463 = vadd.f32 %v365, %v414
        %v464 = vadd.f32 %v366, %v415
        %v465 = vadd.f32 %v367, %v416
        %v466 = vadd.f32 %v368, %v417
        %v467 = vadd.f32 %v369, %v418
        %v468 = vadd.f32 %v370, %v419
        %v469 = vadd.f32 %v273, %v420
        %v470 = vadd.f32 %v274, %v421
        %v471 = vadd.f32 %v275, %v422
        %v472 = vadd.f32 %v276, %v423
        %v473 = vadd.f32 %v277, %v424
        %v474 = vadd.f32 %v278, %v425
        %v475 = vadd.f32 %v279, %v426
        %v476 = vadd.f32 %v280, %v427
        %v477 = vadd.f32 %v281, %v428
        %v478 = vadd.f32 %v282, %v429
        %v479 = vadd.f32 %v283, %v430
        %v480 = vadd.f32 %v284, %v431
        %v481 = vadd.f32 %v285, %v432
        %v482 = vadd.f32 %v286, %v433
        %v483 = vadd.f32 %v287, %v434
        %v484 = vadd.f32 %v288, %v435
        %v485 = vadd.f32 %v289, %v436
        %v486 = vadd.f32 %v290, %v437
        %v487 = vadd.f32 %v291, %v438
        %v488 = vadd.f32 %v292, %v439
        %v489 = vadd.f32 %v293, %v440
        %v490 = vadd.f32 %v294, %v441
        %v491 = vadd.f32 %v295, %v442
        %v492 = vadd.f32 %v296, %v443
        %v493 = vadd.f32 %v297, %v444
        %v494 = vadd.f32 %v298, %v445
        %v495 = vadd.f32 %v299, %v446
        %v496 = vadd.f32 %v300, %v447
        %v497 = vadd.f32 %v301, %v448
        %v498 = vadd.f32 %v302, %v449
        %v499 = vadd.f32 %v303, %v450
        %v500 = vadd.f32 %v304, %v451
        %v501 = vadd.f32 %v305, %v452
        %v502 = vadd.f32 %v306, %v453
        %v503 = vadd.f32 %v307, %v454
        %v504 = vadd.f32 %v308, %v455
        %v505 = vadd.f32 %v309, %v456
        %v506 = vadd.f32 %v310, %v457
        %v507 = vadd.f32 %v311, %v458
        %v508 = vadd.f32 %v312, %v459
        %v509 = vadd.f32 %v313, %v460
        %v510 = vadd.f32 %v314, %v461
        %v511 = vadd.f32 %v315, %v462
        %v512 = vadd.f32 %v316, %v463
        %v513 = vadd.f32 %v317, %v464
        %v514 = vadd.f32 %v318, %v465
        %v515 = vadd.f32 %v319, %v466
        %v516 = vadd.f32 %v320, %v467
        %v517 = vadd.f32 %v321, %v468
        %518 = vst [vmem:[%s268] sm:$0xff] %v469
        %519 = vst [vmem:[%s268 + $0x8] sm:$0xff] %v470
        %520 = vst [vmem:[%s268 + $0x10] sm:$0xff] %v471
        %521 = vst [vmem:[%s268 + $0x18] sm:$0xff] %v472
        %522 = vst [vmem:[%s268 + $0x20] sm:$0xff] %v473
        %523 = vst [vmem:[%s268 + $0x28] sm:$0xff] %v474
        %524 = vst [vmem:[%s268 + $0x30] sm:$0xff] %v475
        %525 = vst [vmem:[%s268 + $0x38] sm:$0xff] %v476
        %526 = vst [vmem:[%s268 + $0x40] sm:$0xff] %v477
        %527 = vst [vmem:[%s268 + $0x48] sm:$0xff] %v478
        %528 = vst [vmem:[%s268 + $0x50] sm:$0xff] %v479
        %529 = vst [vmem:[%s268 + $0x58] sm:$0xff] %v480
        %530 = vst [vmem:[%s268 + $0x60] sm:$0xff] %v481
        %531 = vst [vmem:[%s268 + $0x68] sm:$0xff] %v482
        %532 = vst [vmem:[%s268 + $0x70] sm:$0xff] %v483
        %533 = vst [vmem:[%s268 + $0x78] sm:$0xff] %v484
        %534 = vst [vmem:[%s268 + $0x80] sm:$0xff] %v485
        %535 = vst [vmem:[%s268 + $0x88] sm:$0xff] %v486
        %536 = vst [vmem:[%s268 + $0x90] sm:$0xff] %v487
        %537 = vst [vmem:[%s268 + $0x98] sm:$0xff] %v488
        %538 = vst [vmem:[%s268 + $0xa0] sm:$0xff] %v489
        %539 = vst [vmem:[%s268 + $0xa8] sm:$0xff] %v490
        %540 = vst [vmem:[%s268 + $0xb0] sm:$0xff] %v491
        %541 = vst [vmem:[%s268 + $0xb8] sm:$0xff] %v492
        %542 = vst [vmem:[%s268 + $0xc0] sm:$0xff] %v493
        %543 = vst [vmem:[%s268 + $0xc8] sm:$0xff] %v494
        %544 = vst [vmem:[%s268 + $0xd0] sm:$0xff] %v495
        %545 = vst [vmem:[%s268 + $0xd8] sm:$0xff] %v496
        %546 = vst [vmem:[%s268 + $0xe0] sm:$0xff] %v497
        %547 = vst [vmem:[%s268 + $0xe8] sm:$0xff] %v498
        %548 = vst [vmem:[%s268 + $0xf0] sm:$0xff] %v499
        %549 = vst [vmem:[%s268 + $0xf8] sm:$0xff] %v500
        %550 = vst [vmem:[%s268 + $0x100] sm:$0xff] %v501
        %551 = vst [vmem:[%s268 + $0x108] sm:$0xff] %v502
        %552 = vst [vmem:[%s268 + $0x110] sm:$0xff] %v503
        %553 = vst [vmem:[%s268 + $0x118] sm:$0xff] %v504
        %554 = vst [vmem:[%s268 + $0x120] sm:$0xff] %v505
        %555 = vst [vmem:[%s268 + $0x128] sm:$0xff] %v506
        %556 = vst [vmem:[%s268 + $0x130] sm:$0xff] %v507
        %557 = vst [vmem:[%s268 + $0x138] sm:$0xff] %v508
        %558 = vst [vmem:[%s268 + $0x140] sm:$0xff] %v509
        %559 = vst [vmem:[%s268 + $0x148] sm:$0xff] %v510
        %560 = vst [vmem:[%s268 + $0x150] sm:$0xff] %v511
        %561 = vst [vmem:[%s268 + $0x158] sm:$0xff] %v512
        %562 = vst [vmem:[%s268 + $0x160] sm:$0xff] %v513
        %563 = vst [vmem:[%s268 + $0x168] sm:$0xff] %v514
        %564 = vst [vmem:[%s268 + $0x170] sm:$0xff] %v515
        %565 = vst [vmem:[%s268 + $0x178] sm:$0xff] %v516
        %566 = vst [vmem:[%s268 + $0x180] sm:$0xff] %v517
        %s567 = sand.u32 %s109, 1
        %s568 = scalar_lea.sflag [#allocation4], %s567
        %s569 = sand.u32 %s109, 1
        %s570 = smul.addr %s569, 392
        %s571 = scalar_lea.vmem [#allocation8], %s570
        // Predicated region
        $region45: #{tpu_custom_call.1} parent=31 // pred_check
          %p572 = pneg %p119
        $region46: #{tpu_custom_call.1} parent=31 // pred_check_branch
          %574 = sbr.rel (%p572) target = $region48
        $region47: #{tpu_custom_call.1} parent=31 // pred_region
          %s575 = smul.u32 7, %s23
          %s577 = ssub.s32 6272, 6272
          %578 = vsyncadd %s568, %s577
          %s579 = smul.addr %s575, 7
          %s580 = smul.addr %s579, 128
          %s581 = scalar_lea.hbm %s3, %s580
          %s582 = sshll.u32 %s571, 4
          %s583 = int_to_ptr.vmem [resolvable:$true] %s582
          %588 = dma.vmem_to_hbm [thread:$0]  %s583, 6272, %s581, %s568, 896, 896, 56
        $region48: #{tpu_custom_call.1} parent=31 // pred_fallthru
          _
      $region32: #{tpu_custom_call.1} parent=5 // pred_fallthru
        _
      %p589 = scmp.le.s32.totalorder 2, %s18
      // Predicated region
      $region49: #{tpu_custom_call.1} parent=5 // pred_check
        %p590 = pneg %p589
      $region50: #{tpu_custom_call.1} parent=5 // pred_check_branch
        %592 = sbr.rel (%p590) target = $region52
      $region51: #{tpu_custom_call.1} parent=5 // pred_region
        %s593 = ssub.s32 %s18, 2
        // Predicated region
        $region53: #{tpu_custom_call.1} parent=51 // pred_check
          %p594 = pneg %p125
        $region54: #{tpu_custom_call.1} parent=51 // pred_check_branch
          %596 = sbr.rel (%p594) target = $region56
        $region55: #{tpu_custom_call.1} parent=51 // pred_region
          %s597 = sand.u32 %s110, 1
          %s598 = scalar_lea.sflag [#allocation4], %s597
          %s599 = sand.u32 %s110, 1
          %s600 = smul.addr %s599, 392
          %s601 = scalar_lea.vmem [#allocation8], %s600
          %602 = dma.done %s598, 6272
        $region56: #{tpu_custom_call.1} parent=51 // pred_fallthru
          _
      $region52: #{tpu_custom_call.1} parent=5 // pred_fallthru
        _
    $region6: #{tpu_custom_call.1} parent=1 // loop_footer
      %s22 = sadd.s32 1, %s18
    $region7: #{tpu_custom_call.1} parent=1 // loop_footer_branch
      %17 = sbr.rel target = $region3
    $region8: #{tpu_custom_call.1} parent=1 // loop_exit
      _
    %603 = vsyncpa [#allocation3], 1
    %s604 = scalar_lea.sflag [#allocation3], 1
    %605 = vsyncpa %s604, 1
    %606 = vsyncpa [#allocation6], 1
    %s607 = scalar_lea.sflag [#allocation6], 1
    %608 = vsyncpa %s607, 1
    %609 = vsyncpa [#allocation4], 1
    %s610 = scalar_lea.sflag [#allocation4], 1
    %611 = vsyncpa %s610, 1

</llo_original>
